<compile_context>
chip_gen: v5e
topology: v5e:2x2
jax: 0.10.0
libtpu: 0.0.40
codegen_flags: <defaults>
</compile_context>

<pallas_src>
import math

import jax
import jax.numpy as jnp
from jax.experimental import pallas as pl
from jax.experimental.pallas import tpu as pltpu

LEN_EOS = 459

_VMEM_BUDGET_BYTES = 16 << 20   # conservative: fits v7x (64 MiB phys / 32 MiB scoped)
_MAX_TILE_ROWS = 1024           # >=512 rows already hits ~85% of HBM roofline


def sinusoidal_table(num_tokens: int, dim: int, M: float = 10000.0) -> jnp.ndarray:
    """(num_tokens, dim) table matching the PyTorch PosEnc buffer:
    first half sin, second half cos (concatenated, NOT interleaved)."""
    half = dim // 2
    scale = math.log(M) / half
    freq = jnp.exp(jnp.arange(half, dtype=jnp.float32) * -scale)            # (half,)
    ang = jnp.arange(num_tokens, dtype=jnp.float32)[:, None] * freq[None]   # (S, half)
    return jnp.concatenate([jnp.sin(ang), jnp.cos(ang)], axis=-1)           # (S, dim)


def _sublane(itemsize: int) -> int:
    # sublane packing: 8 rows for 4-byte, 16 for 2-byte, 32 for 1-byte dtypes
    return {4: 8, 2: 16, 1: 32}.get(itemsize, 8)


def _round_up(n: int, m: int) -> int:
    return (n + m - 1) // m * m


def _posenc_kernel_folded(x_ref, pos_ref, o_ref):
    # x_ref/o_ref: (B, TQ, D); pos_ref: (TQ, D) — broadcast over batch.
    o_ref[...] = (x_ref[...] + pos_ref[...]).astype(o_ref.dtype)


def _posenc_kernel_batched(x_ref, pos_ref, o_ref):
    # x_ref/o_ref: (1, TQ, D); pos_ref: (TQ, D)
    o_ref[...] = (x_ref[...] + pos_ref[...]).astype(o_ref.dtype)


def pos_enc(x: jnp.ndarray, pos: jnp.ndarray) -> jnp.ndarray:
    B, S, D = x.shape
    assert pos.shape == (S, D), (pos.shape, (S, D))

    # keep the add (and the output) in x's dtype
    pos = pos.astype(x.dtype)

    itemsize = x.dtype.itemsize
    sub = _sublane(itemsize)
    padded_s = _round_up(S, sub)

    # --- Path A: fold batch into the block (grid over seq tiles only) ----------
    # Per-step VMEM (double-buffered): 2 * (x + out + pos) = 2*(2B+1)*TQ*D*itemsize
    rows_folded = (_VMEM_BUDGET_BYTES // (2 * (2 * B + 1) * D * itemsize)) // sub * sub
    fold_batch = rows_folded >= min(256, padded_s)

    if fold_batch:
        tq = min(rows_folded, _MAX_TILE_ROWS, padded_s)
        # keep >= 2 seq tiles so both v7x TensorCores are fed (when S allows)
        if padded_s > sub:
            tq = min(tq, max(sub, _round_up(pl.cdiv(S, 2), sub)))
        grid = (pl.cdiv(S, tq),)
        in_specs = [
            pl.BlockSpec((B, tq, D), lambda s: (0, s, 0)),   # x: whole batch per seq tile
            pl.BlockSpec((tq, D), lambda s: (s, 0)),          # pos: one fetch per seq tile
        ]
        out_specs = pl.BlockSpec((B, tq, D), lambda s: (0, s, 0))
        semantics = ("parallel",)
        kernel = _posenc_kernel_folded
    else:
        # --- Path B: grid over (seq, batch); seq OUTER so the pos block index is
        # unchanged across the inner batch axis and its DMA is elided -----------
        rows = (_VMEM_BUDGET_BYTES // (2 * 3 * D * itemsize)) // sub * sub
        tq = max(sub, min(rows, _MAX_TILE_ROWS, padded_s))
        grid = (pl.cdiv(S, tq), B)
        in_specs = [
            pl.BlockSpec((1, tq, D), lambda s, b: (b, s, 0)),
            pl.BlockSpec((tq, D), lambda s, b: (s, 0)),
        ]
        out_specs = pl.BlockSpec((1, tq, D), lambda s, b: (b, s, 0))
        semantics = ("parallel", "parallel")
        kernel = _posenc_kernel_batched

    cost = pl.CostEstimate(
        flops=B * S * D,                                            # one add / element
        transcendentals=0,
        bytes_accessed=(2 * B * S * D + S * D) * itemsize,           # x in/out + pos once
    )

    return pl.pallas_call(
        kernel,
        out_shape=jax.ShapeDtypeStruct((B, S, D), x.dtype),
        grid=grid,
        in_specs=in_specs,
        out_specs=out_specs,
        compiler_params=pltpu.CompilerParams(
            dimension_semantics=semantics,
            vmem_limit_bytes=32 << 20,   # v5e default scoped limit is only 16 MiB
        ),
        cost_estimate=cost,
    )(x, pos)


def reference_jax(x, pos):
    return x + pos[None].astype(x.dtype)


if __name__ == "__main__":
    # Module defaults: dim=192, num_tokens=LEN_EOS=459; small batch of 2.
    B, S, D = 2, LEN_EOS, 192
    key = jax.random.PRNGKey(0)
    x = jax.random.normal(key, (B, S, D), dtype=jnp.float32)
    pos = sinusoidal_table(S, D)

    out = pos_enc(x, pos)
    out = jax.block_until_ready(out)

    ref = reference_jax(x, pos)
    assert out.shape == (B, S, D)
    assert jnp.allclose(out, ref, atol=1e-6, rtol=1e-6), (
        f"max abs err {jnp.max(jnp.abs(out - ref))}")
    print("KERNEL_OK")
</pallas_src>

<mosaic_0001>
module attributes {stable_mosaic.version = 11 : i64} {
  func.func @_posenc_kernel_folded(%arg0: i32, %arg1: memref<2x232x192xf32, #tpu.memory_space<vmem>>, %arg2: memref<232x192xf32, #tpu.memory_space<vmem>>, %arg3: memref<2x232x192xf32, #tpu.memory_space<vmem>>) attributes {dimension_semantics = [#tpu.dimension_semantics<parallel>], iteration_bounds = array<i64: 2>, scalar_prefetch = 0 : i64, scratch_operands = 0 : i64, tpu.core_type = #tpu.core_type<tc>, window_params = [{transform_indices = @transform_0, window_bounds = array<i64: 2, 232, 192>}, {transform_indices = @transform_1, window_bounds = array<i64: 232, 192>}, {transform_indices = @transform_2, window_bounds = array<i64: 2, 232, 192>}]} {
    %c0 = arith.constant 0 : index
    %c0_0 = arith.constant 0 : index
    %c0_1 = arith.constant 0 : index
    %0 = vector.load %arg1[%c0, %c0_0, %c0_1] : memref<2x232x192xf32, #tpu.memory_space<vmem>>, vector<2x232x192xf32>
    %c0_2 = arith.constant 0 : index
    %c0_3 = arith.constant 0 : index
    %1 = vector.load %arg2[%c0_2, %c0_3] : memref<232x192xf32, #tpu.memory_space<vmem>>, vector<232x192xf32>
    %2 = vector.shape_cast %1 : vector<232x192xf32> to vector<1x232x192xf32>
    %3 = vector.broadcast %2 : vector<1x232x192xf32> to vector<2x232x192xf32>
    %4 = arith.addf %0, %3 : vector<2x232x192xf32>
    %c0_4 = arith.constant 0 : index
    %c0_5 = arith.constant 0 : index
    %c0_6 = arith.constant 0 : index
    %5 = vector.load %arg3[%c0_4, %c0_5, %c0_6] : memref<2x232x192xf32, #tpu.memory_space<vmem>>, vector<2x232x192xf32>
    tpu.vector_store %arg3[%c0_4, %c0_5, %c0_6], %4 {strides = array<i32>} : memref<2x232x192xf32, #tpu.memory_space<vmem>>, vector<2x232x192xf32>,
    return
  }
  func.func @transform_0(%arg0: i32) -> (i32, i32, i32) {
    %c0_i32 = arith.constant 0 : i32
    %c0_i32_0 = arith.constant 0 : i32
    %c0_i32_1 = arith.constant 0 : i32
    return %c0_i32, %arg0, %c0_i32_0 : i32, i32, i32
  }
  func.func @transform_1(%arg0: i32) -> (i32, i32) {
    %c0_i32 = arith.constant 0 : i32
    %c0_i32_0 = arith.constant 0 : i32
    return %arg0, %c0_i32 : i32, i32
  }
  func.func @transform_2(%arg0: i32) -> (i32, i32, i32) {
    %c0_i32 = arith.constant 0 : i32
    %c0_i32_0 = arith.constant 0 : i32
    %c0_i32_1 = arith.constant 0 : i32
    return %c0_i32, %arg0, %c0_i32_0 : i32, i32, i32
  }
}

</mosaic_0001>

<llo_original>
// kernel: tpu_custom_call.1
$region0: #{tpu_custom_call.1}
  #allocation0 [shape = 'u32[]', space=smem, size = 0x4, offset = 0x4, fixed_abs, tag = 'smem constant byte address 0x4 - core index']
  #allocation1 [shape = 'u32[72,128]{1,0:T(1,128)}', space=vmem, size = 0x9000, scoped, tag = 'internal scratch']
  %s0 = inlined_call_operand.vmem [shape: f32[2,459,192], index: 0, kind: input, shape index: {}]
  %s1 = inlined_call_operand.vmem [shape: f32[459,192], index: 1, kind: input, shape index: {}]
  %s2 = inlined_call_operand.vmem [shape: f32[2,459,192], index: 2, kind: output, shape index: {}]
  %s3 = sld [smem:[#allocation0]]
  $region83: #{tpu_custom_call.1} parent=0
    _
  %s5 = ssub.s32 1, %s3
  %s6 = scalar_select 0, %s5, %s3
  $region1: #{tpu_custom_call.1} parent=0
    #allocation2 [shape = 'u8[950272]{0}', space=vmem, size = 0xe8000, scoped, tag = 'input window, operand 0']
    #allocation3 [shape = 'u8[950272]{0}', space=vmem, size = 0xe8000, scoped, tag = 'output window, operand 0']
    loop: start=0, step=1, limit=4
    $region2: #{tpu_custom_call.1} parent=1 // loop_pre_header
      _
    $region3: #{tpu_custom_call.1} parent=1 // loop_header
      %s8 = sphi 0, %s12
      %p9 = scmp.ge.s32.totalorder %s8, 4
      %s18 = sphi 0, %s20
      %s21 = sphi 0, %s18
      %s22 = sphi 0, %s21
      %s38 = sphi 0, %s22
      %s44 = sphi 0, %s46
      %s47 = sphi 0, %s44
      %s48 = sphi 0, %s47
      %s64 = sphi 0, %s48
      %s70 = sphi 0, %s72
      %s73 = sphi 0, %s70
      %s74 = sphi 0, %s73
      %s90 = sphi 0, %s74
    $region4: #{tpu_custom_call.1} parent=1 // loop_header_branch
      %11 = sbr.rel (%p9) target = $region8
    $region5: #{tpu_custom_call.1} parent=1 // loop_body
      %s13 = ssub.s32 %s8, 1
      %s14 = ssub.s32 %s8, 2
      %s15 = sadd.s32 %s8, 1
      %s16 = ssub.s32 %s8, %s15
      %p17 = scmp.eq.s32.totalorder %s16, 0
      %s19 = sadd.s32 %s18, 1
      %s20 = scalar_select %p17, %s18, %s19
      %p23 = pneg %p17
      %p24 = scmp.eq.s32.totalorder %s8, 1
      %p25 = por %p23, %p24
      %p26 = scmp.ne.s32.totalorder %s18, %s21
      %p27 = scmp.eq.s32.totalorder %s8, 0
      %p28 = por %p26, %p27
      %p29 = scmp.ne.s32.totalorder %s18, %s21
      %p30 = scmp.eq.s32.totalorder %s13, 1
      %p31 = por %p29, %p30
      %p32 = scmp.ne.s32.totalorder %s21, %s22
      %p33 = scmp.eq.s32.totalorder %s13, 0
      %p34 = por %p32, %p33
      %p35 = scmp.ne.s32.totalorder %s21, %s22
      %p36 = scmp.eq.s32.totalorder %s14, 1
      %p37 = por %p35, %p36
      %p39 = scmp.ne.s32.totalorder %s22, %s38
      %p40 = scmp.eq.s32.totalorder %s14, 0
      %p41 = por %p39, %p40
      %s42 = ssub.s32 %s8, %s15
      %p43 = scmp.eq.s32.totalorder %s42, 0
      %s45 = sadd.s32 %s44, 1
      %s46 = scalar_select %p43, %s44, %s45
      %p49 = pneg %p43
      %p50 = scmp.eq.s32.totalorder %s8, 1
      %p51 = por %p49, %p50
      %p52 = scmp.ne.s32.totalorder %s44, %s47
      %p53 = scmp.eq.s32.totalorder %s8, 0
      %p54 = por %p52, %p53
      %p55 = scmp.ne.s32.totalorder %s44, %s47
      %p56 = scmp.eq.s32.totalorder %s13, 1
      %p57 = por %p55, %p56
      %p58 = scmp.ne.s32.totalorder %s47, %s48
      %p59 = scmp.eq.s32.totalorder %s13, 0
      %p60 = por %p58, %p59
      %p61 = scmp.ne.s32.totalorder %s47, %s48
      %p62 = scmp.eq.s32.totalorder %s14, 1
      %p63 = por %p61, %p62
      %p65 = scmp.ne.s32.totalorder %s48, %s64
      %p66 = scmp.eq.s32.totalorder %s14, 0
      %p67 = por %p65, %p66
      %s68 = ssub.s32 %s8, %s15
      %p69 = scmp.eq.s32.totalorder %s68, 0
      %s71 = sadd.s32 %s70, 1
      %s72 = scalar_select %p69, %s70, %s71
      %p75 = pneg %p69
      %p76 = scmp.eq.s32.totalorder %s8, 1
      %p77 = por %p75, %p76
      %p78 = scmp.ne.s32.totalorder %s70, %s73
      %p79 = scmp.eq.s32.totalorder %s8, 0
      %p80 = por %p78, %p79
      %p81 = scmp.ne.s32.totalorder %s70, %s73
      %p82 = scmp.eq.s32.totalorder %s13, 1
      %p83 = por %p81, %p82
      %p84 = scmp.ne.s32.totalorder %s73, %s74
      %p85 = scmp.eq.s32.totalorder %s13, 0
      %p86 = por %p84, %p85
      %p87 = scmp.ne.s32.totalorder %s73, %s74
      %p88 = scmp.eq.s32.totalorder %s14, 1
      %p89 = por %p87, %p88
      %p91 = scmp.ne.s32.totalorder %s74, %s90
      %p92 = scmp.eq.s32.totalorder %s14, 0
      %p93 = por %p91, %p92
      %p94 = scmp.le.s32.totalorder 1, %s8
      %p95 = scmp.lt.s32.totalorder %s8, 3
      %p96 = pnand %p94, %p95
      %p97 = pneg %p96
      // Predicated region
      $region9: #{tpu_custom_call.1} parent=5 // pred_check
        _
      $region10: #{tpu_custom_call.1} parent=5 // pred_check_branch
        %99 = sbr.rel (%p96) target = $region12
      $region11: #{tpu_custom_call.1} parent=5 // pred_region
        %s100 = ssub.s32 %s8, 1
      $region12: #{tpu_custom_call.1} parent=5 // pred_fallthru
        _
      %p101 = scmp.lt.s32.totalorder %s8, 2
      // Predicated region
      $region13: #{tpu_custom_call.1} parent=5 // pred_check
        %p102 = pneg %p101
      $region14: #{tpu_custom_call.1} parent=5 // pred_check_branch
        %104 = sbr.rel (%p102) target = $region16
      $region15: #{tpu_custom_call.1} parent=5 // pred_region
        // Predicated region
        $region17: #{tpu_custom_call.1} parent=15 // pred_check
          %p105 = pneg %p28
        $region18: #{tpu_custom_call.1} parent=15 // pred_check_branch
          %107 = sbr.rel (%p105) target = $region20
        $region19: #{tpu_custom_call.1} parent=15 // pred_region
          %s108 = sand.u32 %s18, 1
          %s109 = sand.u32 %s18, 1
          %s110 = smul.addr %s109, 928
          %s111 = scalar_lea.vmem [#allocation2], %s110
          %s112 = smul.u32 29, %s8
          %s113 = smul.addr %s112, 2
          %s114 = smul.addr %s113, 8
          %s115 = scalar_lea.vmem %s0, %s114
          // Predicated region
          $region21: #{tpu_custom_call.1} parent=19 // pred_check
            _
          $region22: #{tpu_custom_call.1} parent=19 // pred_check_branch
            %117 = sbr.rel (0) target = $region24
          $region23: #{tpu_custom_call.1} parent=19 // pred_region
            // Predicated region
            $region25: #{tpu_custom_call.1} parent=23 // pred_check
              _
            $region26: #{tpu_custom_call.1} parent=23 // pred_check_branch
              %119 = sbr.rel (0) target = $region28
            $region27: #{tpu_custom_call.1} parent=23 // pred_region
              loop: start=0, step=1, limit=1
              $region29: #{tpu_custom_call.1} parent=27 // loop_pre_header
                _
              $region30: #{tpu_custom_call.1} parent=27 // loop_header
                %s121 = sphi 0, %s125
                %p122 = scmp.ge.s32.totalorder %s121, 1
                %s126 = sphi %s115, %s115
                %s127 = sphi %s111, %s111
              $region31: #{tpu_custom_call.1} parent=27 // loop_header_branch
                %124 = sbr.rel (%p122) target = $region35
              $region32: #{tpu_custom_call.1} parent=27 // loop_body
                %v128 = vld [vmem:[%s126] sm:$0xff]
                %129 = vst [vmem:[%s127] sm:$0xff] %v128
                %v130 = vld [vmem:[%s126 + $0x8] sm:$0xff]
                %131 = vst [vmem:[%s127 + $0x8] sm:$0xff] %v130
                %v132 = vld [vmem:[%s126 + $0x10] sm:$0xff]
                %133 = vst [vmem:[%s127 + $0x10] sm:$0xff] %v132
                %v134 = vld [vmem:[%s126 + $0x18] sm:$0xff]
                %135 = vst [vmem:[%s127 + $0x18] sm:$0xff] %v134
                %v136 = vld [vmem:[%s126 + $0x20] sm:$0xff]
                %137 = vst [vmem:[%s127 + $0x20] sm:$0xff] %v136
                %v138 = vld [vmem:[%s126 + $0x28] sm:$0xff]
                %139 = vst [vmem:[%s127 + $0x28] sm:$0xff] %v138
                %v140 = vld [vmem:[%s126 + $0x30] sm:$0xff]
                %141 = vst [vmem:[%s127 + $0x30] sm:$0xff] %v140
                %v142 = vld [vmem:[%s126 + $0x38] sm:$0xff]
                %143 = vst [vmem:[%s127 + $0x38] sm:$0xff] %v142
                %v144 = vld [vmem:[%s126 + $0x40] sm:$0xff]
                %145 = vst [vmem:[%s127 + $0x40] sm:$0xff] %v144
                %v146 = vld [vmem:[%s126 + $0x48] sm:$0xff]
                %147 = vst [vmem:[%s127 + $0x48] sm:$0xff] %v146
                %v148 = vld [vmem:[%s126 + $0x50] sm:$0xff]
                %149 = vst [vmem:[%s127 + $0x50] sm:$0xff] %v148
                %v150 = vld [vmem:[%s126 + $0x58] sm:$0xff]
                %151 = vst [vmem:[%s127 + $0x58] sm:$0xff] %v150
                %v152 = vld [vmem:[%s126 + $0x60] sm:$0xff]
                %153 = vst [vmem:[%s127 + $0x60] sm:$0xff] %v152
                %v154 = vld [vmem:[%s126 + $0x68] sm:$0xff]
                %155 = vst [vmem:[%s127 + $0x68] sm:$0xff] %v154
                %v156 = vld [vmem:[%s126 + $0x70] sm:$0xff]
                %157 = vst [vmem:[%s127 + $0x70] sm:$0xff] %v156
                %v158 = vld [vmem:[%s126 + $0x78] sm:$0xff]
                %159 = vst [vmem:[%s127 + $0x78] sm:$0xff] %v158
                %v160 = vld [vmem:[%s126 + $0x80] sm:$0xff]
                %161 = vst [vmem:[%s127 + $0x80] sm:$0xff] %v160
                %v162 = vld [vmem:[%s126 + $0x88] sm:$0xff]
                %163 = vst [vmem:[%s127 + $0x88] sm:$0xff] %v162
                %v164 = vld [vmem:[%s126 + $0x90] sm:$0xff]
                %165 = vst [vmem:[%s127 + $0x90] sm:$0xff] %v164
                %v166 = vld [vmem:[%s126 + $0x98] sm:$0xff]
                %167 = vst [vmem:[%s127 + $0x98] sm:$0xff] %v166
                %v168 = vld [vmem:[%s126 + $0xa0] sm:$0xff]
                %169 = vst [vmem:[%s127 + $0xa0] sm:$0xff] %v168
                %v170 = vld [vmem:[%s126 + $0xa8] sm:$0xff]
                %171 = vst [vmem:[%s127 + $0xa8] sm:$0xff] %v170
                %v172 = vld [vmem:[%s126 + $0xb0] sm:$0xff]
                %173 = vst [vmem:[%s127 + $0xb0] sm:$0xff] %v172
                %v174 = vld [vmem:[%s126 + $0xb8] sm:$0xff]
                %175 = vst [vmem:[%s127 + $0xb8] sm:$0xff] %v174
                %v176 = vld [vmem:[%s126 + $0xc0] sm:$0xff]
                %177 = vst [vmem:[%s127 + $0xc0] sm:$0xff] %v176
                %v178 = vld [vmem:[%s126 + $0xc8] sm:$0xff]
                %179 = vst [vmem:[%s127 + $0xc8] sm:$0xff] %v178
                %v180 = vld [vmem:[%s126 + $0xd0] sm:$0xff]
                %181 = vst [vmem:[%s127 + $0xd0] sm:$0xff] %v180
                %v182 = vld [vmem:[%s126 + $0xd8] sm:$0xff]
                %183 = vst [vmem:[%s127 + $0xd8] sm:$0xff] %v182
                %v184 = vld [vmem:[%s126 + $0xe0] sm:$0xff]
                %185 = vst [vmem:[%s127 + $0xe0] sm:$0xff] %v184
                %v186 = vld [vmem:[%s126 + $0xe8] sm:$0xff]
                %187 = vst [vmem:[%s127 + $0xe8] sm:$0xff] %v186
                %v188 = vld [vmem:[%s126 + $0xf0] sm:$0xff]
                %189 = vst [vmem:[%s127 + $0xf0] sm:$0xff] %v188
                %v190 = vld [vmem:[%s126 + $0xf8] sm:$0xff]
                %191 = vst [vmem:[%s127 + $0xf8] sm:$0xff] %v190
                %v192 = vld [vmem:[%s126 + $0x100] sm:$0xff]
                %193 = vst [vmem:[%s127 + $0x100] sm:$0xff] %v192
                %v194 = vld [vmem:[%s126 + $0x108] sm:$0xff]
                %195 = vst [vmem:[%s127 + $0x108] sm:$0xff] %v194
                %v196 = vld [vmem:[%s126 + $0x110] sm:$0xff]
                %197 = vst [vmem:[%s127 + $0x110] sm:$0xff] %v196
                %v198 = vld [vmem:[%s126 + $0x118] sm:$0xff]
                %199 = vst [vmem:[%s127 + $0x118] sm:$0xff] %v198
                %v200 = vld [vmem:[%s126 + $0x120] sm:$0xff]
                %201 = vst [vmem:[%s127 + $0x120] sm:$0xff] %v200
                %v202 = vld [vmem:[%s126 + $0x128] sm:$0xff]
                %203 = vst [vmem:[%s127 + $0x128] sm:$0xff] %v202
                %v204 = vld [vmem:[%s126 + $0x130] sm:$0xff]
                %205 = vst [vmem:[%s127 + $0x130] sm:$0xff] %v204
                %v206 = vld [vmem:[%s126 + $0x138] sm:$0xff]
                %207 = vst [vmem:[%s127 + $0x138] sm:$0xff] %v206
                %v208 = vld [vmem:[%s126 + $0x140] sm:$0xff]
                %209 = vst [vmem:[%s127 + $0x140] sm:$0xff] %v208
                %v210 = vld [vmem:[%s126 + $0x148] sm:$0xff]
                %211 = vst [vmem:[%s127 + $0x148] sm:$0xff] %v210
                %v212 = vld [vmem:[%s126 + $0x150] sm:$0xff]
                %213 = vst [vmem:[%s127 + $0x150] sm:$0xff] %v212
                %v214 = vld [vmem:[%s126 + $0x158] sm:$0xff]
                %215 = vst [vmem:[%s127 + $0x158] sm:$0xff] %v214
                %v216 = vld [vmem:[%s126 + $0x160] sm:$0xff]
                %217 = vst [vmem:[%s127 + $0x160] sm:$0xff] %v216
                %v218 = vld [vmem:[%s126 + $0x168] sm:$0xff]
                %219 = vst [vmem:[%s127 + $0x168] sm:$0xff] %v218
                %v220 = vld [vmem:[%s126 + $0x170] sm:$0xff]
                %221 = vst [vmem:[%s127 + $0x170] sm:$0xff] %v220
                %v222 = vld [vmem:[%s126 + $0x178] sm:$0xff]
                %223 = vst [vmem:[%s127 + $0x178] sm:$0xff] %v222
                %v224 = vld [vmem:[%s126 + $0x180] sm:$0xff]
                %225 = vst [vmem:[%s127 + $0x180] sm:$0xff] %v224
                %v226 = vld [vmem:[%s126 + $0x188] sm:$0xff]
                %227 = vst [vmem:[%s127 + $0x188] sm:$0xff] %v226
                %v228 = vld [vmem:[%s126 + $0x190] sm:$0xff]
                %229 = vst [vmem:[%s127 + $0x190] sm:$0xff] %v228
                %v230 = vld [vmem:[%s126 + $0x198] sm:$0xff]
                %231 = vst [vmem:[%s127 + $0x198] sm:$0xff] %v230
                %v232 = vld [vmem:[%s126 + $0x1a0] sm:$0xff]
                %233 = vst [vmem:[%s127 + $0x1a0] sm:$0xff] %v232
                %v234 = vld [vmem:[%s126 + $0x1a8] sm:$0xff]
                %235 = vst [vmem:[%s127 + $0x1a8] sm:$0xff] %v234
                %v236 = vld [vmem:[%s126 + $0x1b0] sm:$0xff]
                %237 = vst [vmem:[%s127 + $0x1b0] sm:$0xff] %v236
                %v238 = vld [vmem:[%s126 + $0x1b8] sm:$0xff]
                %239 = vst [vmem:[%s127 + $0x1b8] sm:$0xff] %v238
                %v240 = vld [vmem:[%s126 + $0x1c0] sm:$0xff]
                %241 = vst [vmem:[%s127 + $0x1c0] sm:$0xff] %v240
                %v242 = vld [vmem:[%s126 + $0x1c8] sm:$0xff]
                %243 = vst [vmem:[%s127 + $0x1c8] sm:$0xff] %v242
                %v244 = vld [vmem:[%s126 + $0x3a0] sm:$0xff]
                %245 = vst [vmem:[%s127 + $0x1d0] sm:$0xff] %v244
                %v246 = vld [vmem:[%s126 + $0x3a8] sm:$0xff]
                %247 = vst [vmem:[%s127 + $0x1d8] sm:$0xff] %v246
                %v248 = vld [vmem:[%s126 + $0x3b0] sm:$0xff]
                %249 = vst [vmem:[%s127 + $0x1e0] sm:$0xff] %v248
                %v250 = vld [vmem:[%s126 + $0x3b8] sm:$0xff]
                %251 = vst [vmem:[%s127 + $0x1e8] sm:$0xff] %v250
                %v252 = vld [vmem:[%s126 + $0x3c0] sm:$0xff]
                %253 = vst [vmem:[%s127 + $0x1f0] sm:$0xff] %v252
                %v254 = vld [vmem:[%s126 + $0x3c8] sm:$0xff]
                %255 = vst [vmem:[%s127 + $0x1f8] sm:$0xff] %v254
                %v256 = vld [vmem:[%s126 + $0x3d0] sm:$0xff]
                %257 = vst [vmem:[%s127 + $0x200] sm:$0xff] %v256
                %v258 = vld [vmem:[%s126 + $0x3d8] sm:$0xff]
                %259 = vst [vmem:[%s127 + $0x208] sm:$0xff] %v258
                %v260 = vld [vmem:[%s126 + $0x3e0] sm:$0xff]
                %261 = vst [vmem:[%s127 + $0x210] sm:$0xff] %v260
                %v262 = vld [vmem:[%s126 + $0x3e8] sm:$0xff]
                %263 = vst [vmem:[%s127 + $0x218] sm:$0xff] %v262
                %v264 = vld [vmem:[%s126 + $0x3f0] sm:$0xff]
                %265 = vst [vmem:[%s127 + $0x220] sm:$0xff] %v264
                %v266 = vld [vmem:[%s126 + $0x3f8] sm:$0xff]
                %267 = vst [vmem:[%s127 + $0x228] sm:$0xff] %v266
                %v268 = vld [vmem:[%s126 + $0x400] sm:$0xff]
                %269 = vst [vmem:[%s127 + $0x230] sm:$0xff] %v268
                %v270 = vld [vmem:[%s126 + $0x408] sm:$0xff]
                %271 = vst [vmem:[%s127 + $0x238] sm:$0xff] %v270
                %v272 = vld [vmem:[%s126 + $0x410] sm:$0xff]
                %273 = vst [vmem:[%s127 + $0x240] sm:$0xff] %v272
                %v274 = vld [vmem:[%s126 + $0x418] sm:$0xff]
                %275 = vst [vmem:[%s127 + $0x248] sm:$0xff] %v274
                %v276 = vld [vmem:[%s126 + $0x420] sm:$0xff]
                %277 = vst [vmem:[%s127 + $0x250] sm:$0xff] %v276
                %v278 = vld [vmem:[%s126 + $0x428] sm:$0xff]
                %279 = vst [vmem:[%s127 + $0x258] sm:$0xff] %v278
                %v280 = vld [vmem:[%s126 + $0x430] sm:$0xff]
                %281 = vst [vmem:[%s127 + $0x260] sm:$0xff] %v280
                %v282 = vld [vmem:[%s126 + $0x438] sm:$0xff]
                %283 = vst [vmem:[%s127 + $0x268] sm:$0xff] %v282
                %v284 = vld [vmem:[%s126 + $0x440] sm:$0xff]
                %285 = vst [vmem:[%s127 + $0x270] sm:$0xff] %v284
                %v286 = vld [vmem:[%s126 + $0x448] sm:$0xff]
                %287 = vst [vmem:[%s127 + $0x278] sm:$0xff] %v286
                %v288 = vld [vmem:[%s126 + $0x450] sm:$0xff]
                %289 = vst [vmem:[%s127 + $0x280] sm:$0xff] %v288
                %v290 = vld [vmem:[%s126 + $0x458] sm:$0xff]
                %291 = vst [vmem:[%s127 + $0x288] sm:$0xff] %v290
                %v292 = vld [vmem:[%s126 + $0x460] sm:$0xff]
                %293 = vst [vmem:[%s127 + $0x290] sm:$0xff] %v292
                %v294 = vld [vmem:[%s126 + $0x468] sm:$0xff]
                %295 = vst [vmem:[%s127 + $0x298] sm:$0xff] %v294
                %v296 = vld [vmem:[%s126 + $0x470] sm:$0xff]
                %297 = vst [vmem:[%s127 + $0x2a0] sm:$0xff] %v296
                %v298 = vld [vmem:[%s126 + $0x478] sm:$0xff]
                %299 = vst [vmem:[%s127 + $0x2a8] sm:$0xff] %v298
                %v300 = vld [vmem:[%s126 + $0x480] sm:$0xff]
                %301 = vst [vmem:[%s127 + $0x2b0] sm:$0xff] %v300
                %v302 = vld [vmem:[%s126 + $0x488] sm:$0xff]
                %303 = vst [vmem:[%s127 + $0x2b8] sm:$0xff] %v302
                %v304 = vld [vmem:[%s126 + $0x490] sm:$0xff]
                %305 = vst [vmem:[%s127 + $0x2c0] sm:$0xff] %v304
                %v306 = vld [vmem:[%s126 + $0x498] sm:$0xff]
                %307 = vst [vmem:[%s127 + $0x2c8] sm:$0xff] %v306
                %v308 = vld [vmem:[%s126 + $0x4a0] sm:$0xff]
                %309 = vst [vmem:[%s127 + $0x2d0] sm:$0xff] %v308
                %v310 = vld [vmem:[%s126 + $0x4a8] sm:$0xff]
                %311 = vst [vmem:[%s127 + $0x2d8] sm:$0xff] %v310
                %v312 = vld [vmem:[%s126 + $0x4b0] sm:$0xff]
                %313 = vst [vmem:[%s127 + $0x2e0] sm:$0xff] %v312
                %v314 = vld [vmem:[%s126 + $0x4b8] sm:$0xff]
                %315 = vst [vmem:[%s127 + $0x2e8] sm:$0xff] %v314
                %v316 = vld [vmem:[%s126 + $0x4c0] sm:$0xff]
                %317 = vst [vmem:[%s127 + $0x2f0] sm:$0xff] %v316
                %v318 = vld [vmem:[%s126 + $0x4c8] sm:$0xff]
                %319 = vst [vmem:[%s127 + $0x2f8] sm:$0xff] %v318
                %v320 = vld [vmem:[%s126 + $0x4d0] sm:$0xff]
                %321 = vst [vmem:[%s127 + $0x300] sm:$0xff] %v320
                %v322 = vld [vmem:[%s126 + $0x4d8] sm:$0xff]
                %323 = vst [vmem:[%s127 + $0x308] sm:$0xff] %v322
                %v324 = vld [vmem:[%s126 + $0x4e0] sm:$0xff]
                %325 = vst [vmem:[%s127 + $0x310] sm:$0xff] %v324
                %v326 = vld [vmem:[%s126 + $0x4e8] sm:$0xff]
                %327 = vst [vmem:[%s127 + $0x318] sm:$0xff] %v326
                %v328 = vld [vmem:[%s126 + $0x4f0] sm:$0xff]
                %329 = vst [vmem:[%s127 + $0x320] sm:$0xff] %v328
                %v330 = vld [vmem:[%s126 + $0x4f8] sm:$0xff]
                %331 = vst [vmem:[%s127 + $0x328] sm:$0xff] %v330
                %v332 = vld [vmem:[%s126 + $0x500] sm:$0xff]
                %333 = vst [vmem:[%s127 + $0x330] sm:$0xff] %v332
                %v334 = vld [vmem:[%s126 + $0x508] sm:$0xff]
                %335 = vst [vmem:[%s127 + $0x338] sm:$0xff] %v334
                %v336 = vld [vmem:[%s126 + $0x510] sm:$0xff]
                %337 = vst [vmem:[%s127 + $0x340] sm:$0xff] %v336
                %v338 = vld [vmem:[%s126 + $0x518] sm:$0xff]
                %339 = vst [vmem:[%s127 + $0x348] sm:$0xff] %v338
                %v340 = vld [vmem:[%s126 + $0x520] sm:$0xff]
                %341 = vst [vmem:[%s127 + $0x350] sm:$0xff] %v340
                %v342 = vld [vmem:[%s126 + $0x528] sm:$0xff]
                %343 = vst [vmem:[%s127 + $0x358] sm:$0xff] %v342
                %v344 = vld [vmem:[%s126 + $0x530] sm:$0xff]
                %345 = vst [vmem:[%s127 + $0x360] sm:$0xff] %v344
                %v346 = vld [vmem:[%s126 + $0x538] sm:$0xff]
                %347 = vst [vmem:[%s127 + $0x368] sm:$0xff] %v346
                %v348 = vld [vmem:[%s126 + $0x540] sm:$0xff]
                %349 = vst [vmem:[%s127 + $0x370] sm:$0xff] %v348
                %v350 = vld [vmem:[%s126 + $0x548] sm:$0xff]
                %351 = vst [vmem:[%s127 + $0x378] sm:$0xff] %v350
                %v352 = vld [vmem:[%s126 + $0x550] sm:$0xff]
                %353 = vst [vmem:[%s127 + $0x380] sm:$0xff] %v352
                %v354 = vld [vmem:[%s126 + $0x558] sm:$0xff]
                %355 = vst [vmem:[%s127 + $0x388] sm:$0xff] %v354
                %v356 = vld [vmem:[%s126 + $0x560] sm:$0xff]
                %357 = vst [vmem:[%s127 + $0x390] sm:$0xff] %v356
                %v358 = vld [vmem:[%s126 + $0x568] sm:$0xff]
                %359 = vst [vmem:[%s127 + $0x398] sm:$0xff] %v358
              $region33: #{tpu_custom_call.1} parent=27 // loop_footer
                %s125 = sadd.s32 1, %s121
              $region34: #{tpu_custom_call.1} parent=27 // loop_footer_branch
                %120 = sbr.rel target = $region30
              $region35: #{tpu_custom_call.1} parent=27 // loop_exit
                _
            $region28: #{tpu_custom_call.1} parent=23 // pred_fallthru
              _
            // Predicated region
            $region36: #{tpu_custom_call.1} parent=23 // pred_check
              _
            $region37: #{tpu_custom_call.1} parent=23 // pred_check_branch
              %361 = sbr.rel target = $region39
            $region38: #{tpu_custom_call.1} parent=23 // pred_region
              _
            $region39: #{tpu_custom_call.1} parent=23 // pred_fallthru
              _
          $region24: #{tpu_custom_call.1} parent=19 // pred_fallthru
            _
          %362 = vnop
        $region20: #{tpu_custom_call.1} parent=15 // pred_fallthru
          _
        // Predicated region
        $region40: #{tpu_custom_call.1} parent=15 // pred_check
          %p363 = pneg %p54
        $region41: #{tpu_custom_call.1} parent=15 // pred_check_branch
          %365 = sbr.rel (%p363) target = $region43
        $region42: #{tpu_custom_call.1} parent=15 // pred_region
          %s366 = smul.u32 29, %s8
          %p367 = scmp.lt.s32.totalorder %s366, 57
          %s368 = scalar_select %p367, %s366, 57
          %s369 = smul.addr %s368, 2
          %s370 = smul.addr %s369, 8
          %s371 = scalar_lea.vmem %s1, %s370
          %s372 = smul.u32 29, %s8
        $region43: #{tpu_custom_call.1} parent=15 // pred_fallthru
          _
      $region16: #{tpu_custom_call.1} parent=5 // pred_fallthru
        _
      %p373 = scmp.le.s32.totalorder 1, %s8
      %p374 = scmp.lt.s32.totalorder %s8, 3
      %p375 = pnand %p373, %p374
      %p376 = pneg %p375
      // Predicated region
      $region44: #{tpu_custom_call.1} parent=5 // pred_check
        _
      $region45: #{tpu_custom_call.1} parent=5 // pred_check_branch
        %378 = sbr.rel (%p375) target = $region47
      $region46: #{tpu_custom_call.1} parent=5 // pred_region
        %s379 = ssub.s32 %s8, 1
        %s380 = sand.u32 %s21, 1
        %s381 = sand.u32 %s21, 1
        %s382 = smul.addr %s381, 928
        %s383 = scalar_lea.vmem [#allocation2], %s382
        // Predicated region
        $region48: #{tpu_custom_call.1} parent=46 // pred_check
          %p384 = pneg %p34
        $region49: #{tpu_custom_call.1} parent=46 // pred_check_branch
          %386 = sbr.rel (%p384) target = $region51
        $region50: #{tpu_custom_call.1} parent=46 // pred_region
          _
        $region51: #{tpu_custom_call.1} parent=46 // pred_fallthru
          _
        %s387 = sand.u32 %s21, 1
        %s388 = sand.u32 %s21, 1
        %s389 = smul.addr %s388, 928
        %s390 = scalar_lea.vmem [#allocation2], %s389
        %p391 = pneg %p34
        %p392 = pneg %p31
        %s393 = smul.u32 29, %s13
        %p394 = scmp.lt.s32.totalorder %s393, 57
        %s395 = scalar_select %p394, %s393, 57
        %s396 = smul.addr %s395, 2
        %s397 = smul.addr %s396, 8
        %s398 = scalar_lea.vmem %s1, %s397
        %p399 = pneg %p60
        %p400 = pneg %p57
        %p401 = pneg %p86
        %p402 = pneg %p83
        %s403 = sand.u32 %s73, 1
        %s404 = sand.u32 %s73, 1
        %s405 = smul.addr %s404, 928
        %s406 = scalar_lea.vmem [#allocation3], %s405
        %s407 = smul.u32 29, %s13
        %s408 = smul.u32 29, %s13
        %p409 = scmp.lt.s32.totalorder %s408, 57
        %s410 = scalar_select %p409, %s408, 57
        %s411 = smul.addr %s410, 2
        %s412 = smul.addr %s411, 8
        %s413 = scalar_lea.vmem %s1, %s412
        %s414 = smul.u32 29, %s13
        %s415 = smul.u32 29, %s13
        %v416 = vld [vmem:[%s383] sm:$0xff]
        %v417 = vld [vmem:[%s383 + $0x8] sm:$0xff]
        %v418 = vld [vmem:[%s383 + $0x10] sm:$0xff]
        %v419 = vld [vmem:[%s383 + $0x18] sm:$0xff]
        %v420 = vld [vmem:[%s383 + $0x20] sm:$0xff]
        %v421 = vld [vmem:[%s383 + $0x28] sm:$0xff]
        %v422 = vld [vmem:[%s383 + $0x30] sm:$0xff]
        %v423 = vld [vmem:[%s383 + $0x38] sm:$0xff]
        %v424 = vld [vmem:[%s383 + $0x40] sm:$0xff]
        %v425 = vld [vmem:[%s383 + $0x48] sm:$0xff]
        %v426 = vld [vmem:[%s383 + $0x50] sm:$0xff]
        %v427 = vld [vmem:[%s383 + $0x58] sm:$0xff]
        %v428 = vld [vmem:[%s383 + $0x60] sm:$0xff]
        %v429 = vld [vmem:[%s383 + $0x68] sm:$0xff]
        %v430 = vld [vmem:[%s383 + $0x70] sm:$0xff]
        %v431 = vld [vmem:[%s383 + $0x78] sm:$0xff]
        %v432 = vld [vmem:[%s383 + $0x80] sm:$0xff]
        %v433 = vld [vmem:[%s383 + $0x88] sm:$0xff]
        %v434 = vld [vmem:[%s383 + $0x90] sm:$0xff]
        %v435 = vld [vmem:[%s383 + $0x98] sm:$0xff]
        %v436 = vld [vmem:[%s383 + $0xa0] sm:$0xff]
        %v437 = vld [vmem:[%s383 + $0xa8] sm:$0xff]
        %v438 = vld [vmem:[%s383 + $0xb0] sm:$0xff]
        %v439 = vld [vmem:[%s383 + $0xb8] sm:$0xff]
        %v440 = vld [vmem:[%s383 + $0xc0] sm:$0xff]
        %v441 = vld [vmem:[%s383 + $0xc8] sm:$0xff]
        %v442 = vld [vmem:[%s383 + $0xd0] sm:$0xff]
        %v443 = vld [vmem:[%s383 + $0xd8] sm:$0xff]
        %v444 = vld [vmem:[%s383 + $0xe0] sm:$0xff]
        %v445 = vld [vmem:[%s383 + $0xe8] sm:$0xff]
        %v446 = vld [vmem:[%s383 + $0xf0] sm:$0xff]
        %v447 = vld [vmem:[%s383 + $0xf8] sm:$0xff]
        %v448 = vld [vmem:[%s383 + $0x100] sm:$0xff]
        %v449 = vld [vmem:[%s383 + $0x108] sm:$0xff]
        %v450 = vld [vmem:[%s383 + $0x110] sm:$0xff]
        %v451 = vld [vmem:[%s383 + $0x118] sm:$0xff]
        %v452 = vld [vmem:[%s383 + $0x120] sm:$0xff]
        %v453 = vld [vmem:[%s383 + $0x128] sm:$0xff]
        %v454 = vld [vmem:[%s383 + $0x130] sm:$0xff]
        %v455 = vld [vmem:[%s383 + $0x138] sm:$0xff]
        %v456 = vld [vmem:[%s383 + $0x140] sm:$0xff]
        %v457 = vld [vmem:[%s383 + $0x148] sm:$0xff]
        %v458 = vld [vmem:[%s383 + $0x150] sm:$0xff]
        %v459 = vld [vmem:[%s383 + $0x158] sm:$0xff]
        %v460 = vld [vmem:[%s383 + $0x160] sm:$0xff]
        %v461 = vld [vmem:[%s383 + $0x168] sm:$0xff]
        %v462 = vld [vmem:[%s383 + $0x170] sm:$0xff]
        %v463 = vld [vmem:[%s383 + $0x178] sm:$0xff]
        %v464 = vld [vmem:[%s383 + $0x180] sm:$0xff]
        %v465 = vld [vmem:[%s383 + $0x188] sm:$0xff]
        %v466 = vld [vmem:[%s383 + $0x190] sm:$0xff]
        %v467 = vld [vmem:[%s383 + $0x198] sm:$0xff]
        %v468 = vld [vmem:[%s383 + $0x1a0] sm:$0xff]
        %v469 = vld [vmem:[%s383 + $0x1a8] sm:$0xff]
        %v470 = vld [vmem:[%s383 + $0x1b0] sm:$0xff]
        %v471 = vld [vmem:[%s383 + $0x1b8] sm:$0xff]
        %v472 = vld [vmem:[%s383 + $0x1c0] sm:$0xff]
        %v473 = vld [vmem:[%s383 + $0x1c8] sm:$0xff]
        %v474 = vld [vmem:[%s383 + $0x1d0] sm:$0xff]
        %v475 = vld [vmem:[%s383 + $0x1d8] sm:$0xff]
        %v476 = vld [vmem:[%s383 + $0x1e0] sm:$0xff]
        %v477 = vld [vmem:[%s383 + $0x1e8] sm:$0xff]
        %v478 = vld [vmem:[%s383 + $0x1f0] sm:$0xff]
        %v479 = vld [vmem:[%s383 + $0x1f8] sm:$0xff]
        %v480 = vld [vmem:[%s383 + $0x200] sm:$0xff]
        %v481 = vld [vmem:[%s383 + $0x208] sm:$0xff]
        %v482 = vld [vmem:[%s383 + $0x210] sm:$0xff]
        %v483 = vld [vmem:[%s383 + $0x218] sm:$0xff]
        %v484 = vld [vmem:[%s383 + $0x220] sm:$0xff]
        %v485 = vld [vmem:[%s383 + $0x228] sm:$0xff]
        %v486 = vld [vmem:[%s383 + $0x230] sm:$0xff]
        %v487 = vld [vmem:[%s383 + $0x238] sm:$0xff]
        %v488 = vld [vmem:[%s383 + $0x240] sm:$0xff]
        %v489 = vld [vmem:[%s383 + $0x248] sm:$0xff]
        %v490 = vld [vmem:[%s383 + $0x250] sm:$0xff]
        %v491 = vld [vmem:[%s383 + $0x258] sm:$0xff]
        %v492 = vld [vmem:[%s383 + $0x260] sm:$0xff]
        %v493 = vld [vmem:[%s383 + $0x268] sm:$0xff]
        %v494 = vld [vmem:[%s383 + $0x270] sm:$0xff]
        %v495 = vld [vmem:[%s383 + $0x278] sm:$0xff]
        %v496 = vld [vmem:[%s383 + $0x280] sm:$0xff]
        %v497 = vld [vmem:[%s383 + $0x288] sm:$0xff]
        %v498 = vld [vmem:[%s383 + $0x290] sm:$0xff]
        %v499 = vld [vmem:[%s383 + $0x298] sm:$0xff]
        %v500 = vld [vmem:[%s383 + $0x2a0] sm:$0xff]
        %v501 = vld [vmem:[%s383 + $0x2a8] sm:$0xff]
        %v502 = vld [vmem:[%s383 + $0x2b0] sm:$0xff]
        %v503 = vld [vmem:[%s383 + $0x2b8] sm:$0xff]
        %v504 = vld [vmem:[%s383 + $0x2c0] sm:$0xff]
        %v505 = vld [vmem:[%s383 + $0x2c8] sm:$0xff]
        %v506 = vld [vmem:[%s383 + $0x2d0] sm:$0xff]
        %v507 = vld [vmem:[%s383 + $0x2d8] sm:$0xff]
        %v508 = vld [vmem:[%s383 + $0x2e0] sm:$0xff]
        %v509 = vld [vmem:[%s383 + $0x2e8] sm:$0xff]
        %v510 = vld [vmem:[%s383 + $0x2f0] sm:$0xff]
        %v511 = vld [vmem:[%s383 + $0x2f8] sm:$0xff]
        %v512 = vld [vmem:[%s383 + $0x300] sm:$0xff]
        %v513 = vld [vmem:[%s383 + $0x308] sm:$0xff]
        %v514 = vld [vmem:[%s383 + $0x310] sm:$0xff]
        %v515 = vld [vmem:[%s383 + $0x318] sm:$0xff]
        %v516 = vld [vmem:[%s383 + $0x320] sm:$0xff]
        %v517 = vld [vmem:[%s383 + $0x328] sm:$0xff]
        %v518 = vld [vmem:[%s383 + $0x330] sm:$0xff]
        %v519 = vld [vmem:[%s383 + $0x338] sm:$0xff]
        %v520 = vld [vmem:[%s383 + $0x340] sm:$0xff]
        %v521 = vld [vmem:[%s383 + $0x348] sm:$0xff]
        %v522 = vld [vmem:[%s383 + $0x350] sm:$0xff]
        %v523 = vld [vmem:[%s383 + $0x358] sm:$0xff]
        %v524 = vld [vmem:[%s383 + $0x360] sm:$0xff]
        %v525 = vld [vmem:[%s383 + $0x368] sm:$0xff]
        %v526 = vld [vmem:[%s383 + $0x370] sm:$0xff]
        %v527 = vld [vmem:[%s383 + $0x378] sm:$0xff]
        %v528 = vld [vmem:[%s383 + $0x380] sm:$0xff]
        %v529 = vld [vmem:[%s383 + $0x388] sm:$0xff]
        %v530 = vld [vmem:[%s383 + $0x390] sm:$0xff]
        %v531 = vld [vmem:[%s383 + $0x398] sm:$0xff]
        %v532 = vld [vmem:[%s413] sm:$0xff]
        %v533 = vld [vmem:[%s413 + $0x8] sm:$0xff]
        %v534 = vld [vmem:[%s413 + $0x10] sm:$0xff]
        %v535 = vld [vmem:[%s413 + $0x18] sm:$0xff]
        %v536 = vld [vmem:[%s413 + $0x20] sm:$0xff]
        %v537 = vld [vmem:[%s413 + $0x28] sm:$0xff]
        %v538 = vld [vmem:[%s413 + $0x30] sm:$0xff]
        %v539 = vld [vmem:[%s413 + $0x38] sm:$0xff]
        %v540 = vld [vmem:[%s413 + $0x40] sm:$0xff]
        %v541 = vld [vmem:[%s413 + $0x48] sm:$0xff]
        %v542 = vld [vmem:[%s413 + $0x50] sm:$0xff]
        %v543 = vld [vmem:[%s413 + $0x58] sm:$0xff]
        %v544 = vld [vmem:[%s413 + $0x60] sm:$0xff]
        %v545 = vld [vmem:[%s413 + $0x68] sm:$0xff]
        %v546 = vld [vmem:[%s413 + $0x70] sm:$0xff]
        %v547 = vld [vmem:[%s413 + $0x78] sm:$0xff]
        %v548 = vld [vmem:[%s413 + $0x80] sm:$0xff]
        %v549 = vld [vmem:[%s413 + $0x88] sm:$0xff]
        %v550 = vld [vmem:[%s413 + $0x90] sm:$0xff]
        %v551 = vld [vmem:[%s413 + $0x98] sm:$0xff]
        %v552 = vld [vmem:[%s413 + $0xa0] sm:$0xff]
        %v553 = vld [vmem:[%s413 + $0xa8] sm:$0xff]
        %v554 = vld [vmem:[%s413 + $0xb0] sm:$0xff]
        %v555 = vld [vmem:[%s413 + $0xb8] sm:$0xff]
        %v556 = vld [vmem:[%s413 + $0xc0] sm:$0xff]
        %v557 = vld [vmem:[%s413 + $0xc8] sm:$0xff]
        %v558 = vld [vmem:[%s413 + $0xd0] sm:$0xff]
        %v559 = vld [vmem:[%s413 + $0xd8] sm:$0xff]
        %v560 = vld [vmem:[%s413 + $0xe0] sm:$0xff]
        %v561 = vld [vmem:[%s413 + $0xe8] sm:$0xff]
        %v562 = vld [vmem:[%s413 + $0xf0] sm:$0xff]
        %v563 = vld [vmem:[%s413 + $0xf8] sm:$0xff]
        %v564 = vld [vmem:[%s413 + $0x100] sm:$0xff]
        %v565 = vld [vmem:[%s413 + $0x108] sm:$0xff]
        %v566 = vld [vmem:[%s413 + $0x110] sm:$0xff]
        %v567 = vld [vmem:[%s413 + $0x118] sm:$0xff]
        %v568 = vld [vmem:[%s413 + $0x120] sm:$0xff]
        %v569 = vld [vmem:[%s413 + $0x128] sm:$0xff]
        %v570 = vld [vmem:[%s413 + $0x130] sm:$0xff]
        %v571 = vld [vmem:[%s413 + $0x138] sm:$0xff]
        %v572 = vld [vmem:[%s413 + $0x140] sm:$0xff]
        %v573 = vld [vmem:[%s413 + $0x148] sm:$0xff]
        %v574 = vld [vmem:[%s413 + $0x150] sm:$0xff]
        %v575 = vld [vmem:[%s413 + $0x158] sm:$0xff]
        %v576 = vld [vmem:[%s413 + $0x160] sm:$0xff]
        %v577 = vld [vmem:[%s413 + $0x168] sm:$0xff]
        %v578 = vld [vmem:[%s413 + $0x170] sm:$0xff]
        %v579 = vld [vmem:[%s413 + $0x178] sm:$0xff]
        %v580 = vld [vmem:[%s413 + $0x180] sm:$0xff]
        %v581 = vld [vmem:[%s413 + $0x188] sm:$0xff]
        %v582 = vld [vmem:[%s413 + $0x190] sm:$0xff]
        %v583 = vld [vmem:[%s413 + $0x198] sm:$0xff]
        %v584 = vld [vmem:[%s413 + $0x1a0] sm:$0xff]
        %v585 = vld [vmem:[%s413 + $0x1a8] sm:$0xff]
        %v586 = vld [vmem:[%s413 + $0x1b0] sm:$0xff]
        %v587 = vld [vmem:[%s413 + $0x1b8] sm:$0xff]
        %v588 = vld [vmem:[%s413 + $0x1c0] sm:$0xff]
        %v589 = vld [vmem:[%s413 + $0x1c8] sm:$0xff]
        %v590 = vadd.f32 %v416, %v532
        %v591 = vadd.f32 %v417, %v533
        %v592 = vadd.f32 %v418, %v534
        %v593 = vadd.f32 %v419, %v535
        %v594 = vadd.f32 %v420, %v536
        %v595 = vadd.f32 %v421, %v537
        %v596 = vadd.f32 %v422, %v538
        %v597 = vadd.f32 %v423, %v539
        %v598 = vadd.f32 %v424, %v540
        %v599 = vadd.f32 %v425, %v541
        %v600 = vadd.f32 %v426, %v542
        %v601 = vadd.f32 %v427, %v543
        %v602 = vadd.f32 %v428, %v544
        %v603 = vadd.f32 %v429, %v545
        %v604 = vadd.f32 %v430, %v546
        %v605 = vadd.f32 %v431, %v547
        %v606 = vadd.f32 %v432, %v548
        %v607 = vadd.f32 %v433, %v549
        %v608 = vadd.f32 %v434, %v550
        %v609 = vadd.f32 %v435, %v551
        %v610 = vadd.f32 %v436, %v552
        %v611 = vadd.f32 %v437, %v553
        %v612 = vadd.f32 %v438, %v554
        %v613 = vadd.f32 %v439, %v555
        %v614 = vadd.f32 %v440, %v556
        %v615 = vadd.f32 %v441, %v557
        %v616 = vadd.f32 %v442, %v558
        %v617 = vadd.f32 %v443, %v559
        %v618 = vadd.f32 %v444, %v560
        %v619 = vadd.f32 %v445, %v561
        %v620 = vadd.f32 %v446, %v562
        %v621 = vadd.f32 %v447, %v563
        %v622 = vadd.f32 %v448, %v564
        %v623 = vadd.f32 %v449, %v565
        %v624 = vadd.f32 %v450, %v566
        %v625 = vadd.f32 %v451, %v567
        %v626 = vadd.f32 %v452, %v568
        %v627 = vadd.f32 %v453, %v569
        %v628 = vadd.f32 %v454, %v570
        %v629 = vadd.f32 %v455, %v571
        %v630 = vadd.f32 %v456, %v572
        %v631 = vadd.f32 %v457, %v573
        %v632 = vadd.f32 %v458, %v574
        %v633 = vadd.f32 %v459, %v575
        %v634 = vadd.f32 %v460, %v576
        %v635 = vadd.f32 %v461, %v577
        %v636 = vadd.f32 %v462, %v578
        %v637 = vadd.f32 %v463, %v579
        %v638 = vadd.f32 %v464, %v580
        %v639 = vadd.f32 %v465, %v581
        %v640 = vadd.f32 %v466, %v582
        %v641 = vadd.f32 %v467, %v583
        %v642 = vadd.f32 %v468, %v584
        %v643 = vadd.f32 %v469, %v585
        %v644 = vadd.f32 %v470, %v586
        %v645 = vadd.f32 %v471, %v587
        %v646 = vadd.f32 %v472, %v588
        %v647 = vadd.f32 %v473, %v589
        %v648 = vadd.f32 %v474, %v532
        %v649 = vadd.f32 %v475, %v533
        %v650 = vadd.f32 %v476, %v534
        %v651 = vadd.f32 %v477, %v535
        %v652 = vadd.f32 %v478, %v536
        %v653 = vadd.f32 %v479, %v537
        %v654 = vadd.f32 %v480, %v538
        %v655 = vadd.f32 %v481, %v539
        %v656 = vadd.f32 %v482, %v540
        %v657 = vadd.f32 %v483, %v541
        %v658 = vadd.f32 %v484, %v542
        %v659 = vadd.f32 %v485, %v543
        %v660 = vadd.f32 %v486, %v544
        %v661 = vadd.f32 %v487, %v545
        %v662 = vadd.f32 %v488, %v546
        %v663 = vadd.f32 %v489, %v547
        %v664 = vadd.f32 %v490, %v548
        %v665 = vadd.f32 %v491, %v549
        %v666 = vadd.f32 %v492, %v550
        %v667 = vadd.f32 %v493, %v551
        %v668 = vadd.f32 %v494, %v552
        %v669 = vadd.f32 %v495, %v553
        %v670 = vadd.f32 %v496, %v554
        %v671 = vadd.f32 %v497, %v555
        %v672 = vadd.f32 %v498, %v556
        %v673 = vadd.f32 %v499, %v557
        %v674 = vadd.f32 %v500, %v558
        %v675 = vadd.f32 %v501, %v559
        %v676 = vadd.f32 %v502, %v560
        %v677 = vadd.f32 %v503, %v561
        %v678 = vadd.f32 %v504, %v562
        %v679 = vadd.f32 %v505, %v563
        %v680 = vadd.f32 %v506, %v564
        %v681 = vadd.f32 %v507, %v565
        %v682 = vadd.f32 %v508, %v566
        %v683 = vadd.f32 %v509, %v567
        %v684 = vadd.f32 %v510, %v568
        %v685 = vadd.f32 %v511, %v569
        %v686 = vadd.f32 %v512, %v570
        %v687 = vadd.f32 %v513, %v571
        %v688 = vadd.f32 %v514, %v572
        %v689 = vadd.f32 %v515, %v573
        %v690 = vadd.f32 %v516, %v574
        %v691 = vadd.f32 %v517, %v575
        %v692 = vadd.f32 %v518, %v576
        %v693 = vadd.f32 %v519, %v577
        %v694 = vadd.f32 %v520, %v578
        %v695 = vadd.f32 %v521, %v579
        %v696 = vadd.f32 %v522, %v580
        %v697 = vadd.f32 %v523, %v581
        %v698 = vadd.f32 %v524, %v582
        %v699 = vadd.f32 %v525, %v583
        %v700 = vadd.f32 %v526, %v584
        %v701 = vadd.f32 %v527, %v585
        %v702 = vadd.f32 %v528, %v586
        %v703 = vadd.f32 %v529, %v587
        %v704 = vadd.f32 %v530, %v588
        %v705 = vadd.f32 %v531, %v589
        %706 = vst [vmem:[%s406] sm:$0xff] %v590
        %vm707 = vcmask 523264
        %708 = vst.msk [vmem:[%s406 + $0x8] sm:$0xff] %vm707, %v591
        %709 = vst [vmem:[%s406 + $0x10] sm:$0xff] %v592
        %710 = vst.msk [vmem:[%s406 + $0x18] sm:$0xff] %vm707, %v593
        %711 = vst [vmem:[%s406 + $0x20] sm:$0xff] %v594
        %712 = vst.msk [vmem:[%s406 + $0x28] sm:$0xff] %vm707, %v595
        %713 = vst [vmem:[%s406 + $0x30] sm:$0xff] %v596
        %714 = vst.msk [vmem:[%s406 + $0x38] sm:$0xff] %vm707, %v597
        %715 = vst [vmem:[%s406 + $0x40] sm:$0xff] %v598
        %716 = vst.msk [vmem:[%s406 + $0x48] sm:$0xff] %vm707, %v599
        %717 = vst [vmem:[%s406 + $0x50] sm:$0xff] %v600
        %718 = vst.msk [vmem:[%s406 + $0x58] sm:$0xff] %vm707, %v601
        %719 = vst [vmem:[%s406 + $0x60] sm:$0xff] %v602
        %720 = vst.msk [vmem:[%s406 + $0x68] sm:$0xff] %vm707, %v603
        %721 = vst [vmem:[%s406 + $0x70] sm:$0xff] %v604
        %722 = vst.msk [vmem:[%s406 + $0x78] sm:$0xff] %vm707, %v605
        %723 = vst [vmem:[%s406 + $0x80] sm:$0xff] %v606
        %724 = vst.msk [vmem:[%s406 + $0x88] sm:$0xff] %vm707, %v607
        %725 = vst [vmem:[%s406 + $0x90] sm:$0xff] %v608
        %726 = vst.msk [vmem:[%s406 + $0x98] sm:$0xff] %vm707, %v609
        %727 = vst [vmem:[%s406 + $0xa0] sm:$0xff] %v610
        %728 = vst.msk [vmem:[%s406 + $0xa8] sm:$0xff] %vm707, %v611
        %729 = vst [vmem:[%s406 + $0xb0] sm:$0xff] %v612
        %730 = vst.msk [vmem:[%s406 + $0xb8] sm:$0xff] %vm707, %v613
        %731 = vst [vmem:[%s406 + $0xc0] sm:$0xff] %v614
        %732 = vst.msk [vmem:[%s406 + $0xc8] sm:$0xff] %vm707, %v615
        %733 = vst [vmem:[%s406 + $0xd0] sm:$0xff] %v616
        %734 = vst.msk [vmem:[%s406 + $0xd8] sm:$0xff] %vm707, %v617
        %735 = vst [vmem:[%s406 + $0xe0] sm:$0xff] %v618
        %736 = vst.msk [vmem:[%s406 + $0xe8] sm:$0xff] %vm707, %v619
        %737 = vst [vmem:[%s406 + $0xf0] sm:$0xff] %v620
        %738 = vst.msk [vmem:[%s406 + $0xf8] sm:$0xff] %vm707, %v621
        %739 = vst [vmem:[%s406 + $0x100] sm:$0xff] %v622
        %740 = vst.msk [vmem:[%s406 + $0x108] sm:$0xff] %vm707, %v623
        %741 = vst [vmem:[%s406 + $0x110] sm:$0xff] %v624
        %742 = vst.msk [vmem:[%s406 + $0x118] sm:$0xff] %vm707, %v625
        %743 = vst [vmem:[%s406 + $0x120] sm:$0xff] %v626
        %744 = vst.msk [vmem:[%s406 + $0x128] sm:$0xff] %vm707, %v627
        %745 = vst [vmem:[%s406 + $0x130] sm:$0xff] %v628
        %746 = vst.msk [vmem:[%s406 + $0x138] sm:$0xff] %vm707, %v629
        %747 = vst [vmem:[%s406 + $0x140] sm:$0xff] %v630
        %748 = vst.msk [vmem:[%s406 + $0x148] sm:$0xff] %vm707, %v631
        %749 = vst [vmem:[%s406 + $0x150] sm:$0xff] %v632
        %750 = vst.msk [vmem:[%s406 + $0x158] sm:$0xff] %vm707, %v633
        %751 = vst [vmem:[%s406 + $0x160] sm:$0xff] %v634
        %752 = vst.msk [vmem:[%s406 + $0x168] sm:$0xff] %vm707, %v635
        %753 = vst [vmem:[%s406 + $0x170] sm:$0xff] %v636
        %754 = vst.msk [vmem:[%s406 + $0x178] sm:$0xff] %vm707, %v637
        %755 = vst [vmem:[%s406 + $0x180] sm:$0xff] %v638
        %756 = vst.msk [vmem:[%s406 + $0x188] sm:$0xff] %vm707, %v639
        %757 = vst [vmem:[%s406 + $0x190] sm:$0xff] %v640
        %758 = vst.msk [vmem:[%s406 + $0x198] sm:$0xff] %vm707, %v641
        %759 = vst [vmem:[%s406 + $0x1a0] sm:$0xff] %v642
        %760 = vst.msk [vmem:[%s406 + $0x1a8] sm:$0xff] %vm707, %v643
        %761 = vst [vmem:[%s406 + $0x1b0] sm:$0xff] %v644
        %762 = vst.msk [vmem:[%s406 + $0x1b8] sm:$0xff] %vm707, %v645
        %763 = vst [vmem:[%s406 + $0x1c0] sm:$0xff] %v646
        %764 = vst.msk [vmem:[%s406 + $0x1c8] sm:$0xff] %vm707, %v647
        %765 = vst [vmem:[%s406 + $0x1d0] sm:$0xff] %v648
        %766 = vst.msk [vmem:[%s406 + $0x1d8] sm:$0xff] %vm707, %v649
        %767 = vst [vmem:[%s406 + $0x1e0] sm:$0xff] %v650
        %768 = vst.msk [vmem:[%s406 + $0x1e8] sm:$0xff] %vm707, %v651
        %769 = vst [vmem:[%s406 + $0x1f0] sm:$0xff] %v652
        %770 = vst.msk [vmem:[%s406 + $0x1f8] sm:$0xff] %vm707, %v653
        %771 = vst [vmem:[%s406 + $0x200] sm:$0xff] %v654
        %772 = vst.msk [vmem:[%s406 + $0x208] sm:$0xff] %vm707, %v655
        %773 = vst [vmem:[%s406 + $0x210] sm:$0xff] %v656
        %774 = vst.msk [vmem:[%s406 + $0x218] sm:$0xff] %vm707, %v657
        %775 = vst [vmem:[%s406 + $0x220] sm:$0xff] %v658
        %776 = vst.msk [vmem:[%s406 + $0x228] sm:$0xff] %vm707, %v659
        %777 = vst [vmem:[%s406 + $0x230] sm:$0xff] %v660
        %778 = vst.msk [vmem:[%s406 + $0x238] sm:$0xff] %vm707, %v661
        %779 = vst [vmem:[%s406 + $0x240] sm:$0xff] %v662
        %780 = vst.msk [vmem:[%s406 + $0x248] sm:$0xff] %vm707, %v663
        %781 = vst [vmem:[%s406 + $0x250] sm:$0xff] %v664
        %782 = vst.msk [vmem:[%s406 + $0x258] sm:$0xff] %vm707, %v665
        %783 = vst [vmem:[%s406 + $0x260] sm:$0xff] %v666
        %784 = vst.msk [vmem:[%s406 + $0x268] sm:$0xff] %vm707, %v667
        %785 = vst [vmem:[%s406 + $0x270] sm:$0xff] %v668
        %786 = vst.msk [vmem:[%s406 + $0x278] sm:$0xff] %vm707, %v669
        %787 = vst [vmem:[%s406 + $0x280] sm:$0xff] %v670
        %788 = vst.msk [vmem:[%s406 + $0x288] sm:$0xff] %vm707, %v671
        %789 = vst [vmem:[%s406 + $0x290] sm:$0xff] %v672
        %790 = vst.msk [vmem:[%s406 + $0x298] sm:$0xff] %vm707, %v673
        %791 = vst [vmem:[%s406 + $0x2a0] sm:$0xff] %v674
        %792 = vst.msk [vmem:[%s406 + $0x2a8] sm:$0xff] %vm707, %v675
        %793 = vst [vmem:[%s406 + $0x2b0] sm:$0xff] %v676
        %794 = vst.msk [vmem:[%s406 + $0x2b8] sm:$0xff] %vm707, %v677
        %795 = vst [vmem:[%s406 + $0x2c0] sm:$0xff] %v678
        %796 = vst.msk [vmem:[%s406 + $0x2c8] sm:$0xff] %vm707, %v679
        %797 = vst [vmem:[%s406 + $0x2d0] sm:$0xff] %v680
        %798 = vst.msk [vmem:[%s406 + $0x2d8] sm:$0xff] %vm707, %v681
        %799 = vst [vmem:[%s406 + $0x2e0] sm:$0xff] %v682
        %800 = vst.msk [vmem:[%s406 + $0x2e8] sm:$0xff] %vm707, %v683
        %801 = vst [vmem:[%s406 + $0x2f0] sm:$0xff] %v684
        %802 = vst.msk [vmem:[%s406 + $0x2f8] sm:$0xff] %vm707, %v685
        %803 = vst [vmem:[%s406 + $0x300] sm:$0xff] %v686
        %804 = vst.msk [vmem:[%s406 + $0x308] sm:$0xff] %vm707, %v687
        %805 = vst [vmem:[%s406 + $0x310] sm:$0xff] %v688
        %806 = vst.msk [vmem:[%s406 + $0x318] sm:$0xff] %vm707, %v689
        %807 = vst [vmem:[%s406 + $0x320] sm:$0xff] %v690
        %808 = vst.msk [vmem:[%s406 + $0x328] sm:$0xff] %vm707, %v691
        %809 = vst [vmem:[%s406 + $0x330] sm:$0xff] %v692
        %810 = vst.msk [vmem:[%s406 + $0x338] sm:$0xff] %vm707, %v693
        %811 = vst [vmem:[%s406 + $0x340] sm:$0xff] %v694
        %812 = vst.msk [vmem:[%s406 + $0x348] sm:$0xff] %vm707, %v695
        %813 = vst [vmem:[%s406 + $0x350] sm:$0xff] %v696
        %814 = vst.msk [vmem:[%s406 + $0x358] sm:$0xff] %vm707, %v697
        %815 = vst [vmem:[%s406 + $0x360] sm:$0xff] %v698
        %816 = vst.msk [vmem:[%s406 + $0x368] sm:$0xff] %vm707, %v699
        %817 = vst [vmem:[%s406 + $0x370] sm:$0xff] %v700
        %818 = vst.msk [vmem:[%s406 + $0x378] sm:$0xff] %vm707, %v701
        %819 = vst [vmem:[%s406 + $0x380] sm:$0xff] %v702
        %820 = vst.msk [vmem:[%s406 + $0x388] sm:$0xff] %vm707, %v703
        %821 = vst [vmem:[%s406 + $0x390] sm:$0xff] %v704
        %822 = vst.msk [vmem:[%s406 + $0x398] sm:$0xff] %vm707, %v705
        %s823 = sand.u32 %s73, 1
        %s824 = sand.u32 %s73, 1
        %s825 = smul.addr %s824, 928
        %s826 = scalar_lea.vmem [#allocation3], %s825
        // Predicated region
        $region52: #{tpu_custom_call.1} parent=46 // pred_check
          %p827 = pneg %p83
        $region53: #{tpu_custom_call.1} parent=46 // pred_check_branch
          %829 = sbr.rel (%p827) target = $region55
        $region54: #{tpu_custom_call.1} parent=46 // pred_region
          %s830 = smul.u32 29, %s13
          %s831 = smul.addr %s830, 2
          %s832 = smul.addr %s831, 8
          %s833 = scalar_lea.vmem %s2, %s832
          // Predicated region
          $region56: #{tpu_custom_call.1} parent=54 // pred_check
            _
          $region57: #{tpu_custom_call.1} parent=54 // pred_check_branch
            %835 = sbr.rel (0) target = $region59
          $region58: #{tpu_custom_call.1} parent=54 // pred_region
            // Predicated region
            $region60: #{tpu_custom_call.1} parent=58 // pred_check
              _
            $region61: #{tpu_custom_call.1} parent=58 // pred_check_branch
              %837 = sbr.rel (0) target = $region63
            $region62: #{tpu_custom_call.1} parent=58 // pred_region
              loop: start=0, step=1, limit=1
              $region64: #{tpu_custom_call.1} parent=62 // loop_pre_header
                _
              $region65: #{tpu_custom_call.1} parent=62 // loop_header
                %s839 = sphi 0, %s843
                %p840 = scmp.ge.s32.totalorder %s839, 1
                %s844 = sphi %s826, %s826
                %s845 = sphi %s833, %s833
              $region66: #{tpu_custom_call.1} parent=62 // loop_header_branch
                %842 = sbr.rel (%p840) target = $region70
              $region67: #{tpu_custom_call.1} parent=62 // loop_body
                %v846 = vld [vmem:[%s844] sm:$0xff]
                %847 = vst [vmem:[%s845] sm:$0xff] %v846
                %v848 = vld [vmem:[%s844 + $0x8] sm:$0xff]
                %849 = vst [vmem:[%s845 + $0x8] sm:$0xff] %v848
                %v850 = vld [vmem:[%s844 + $0x10] sm:$0xff]
                %851 = vst [vmem:[%s845 + $0x10] sm:$0xff] %v850
                %v852 = vld [vmem:[%s844 + $0x18] sm:$0xff]
                %853 = vst [vmem:[%s845 + $0x18] sm:$0xff] %v852
                %v854 = vld [vmem:[%s844 + $0x20] sm:$0xff]
                %855 = vst [vmem:[%s845 + $0x20] sm:$0xff] %v854
                %v856 = vld [vmem:[%s844 + $0x28] sm:$0xff]
                %857 = vst [vmem:[%s845 + $0x28] sm:$0xff] %v856
                %v858 = vld [vmem:[%s844 + $0x30] sm:$0xff]
                %859 = vst [vmem:[%s845 + $0x30] sm:$0xff] %v858
                %v860 = vld [vmem:[%s844 + $0x38] sm:$0xff]
                %861 = vst [vmem:[%s845 + $0x38] sm:$0xff] %v860
                %v862 = vld [vmem:[%s844 + $0x40] sm:$0xff]
                %863 = vst [vmem:[%s845 + $0x40] sm:$0xff] %v862
                %v864 = vld [vmem:[%s844 + $0x48] sm:$0xff]
                %865 = vst [vmem:[%s845 + $0x48] sm:$0xff] %v864
                %v866 = vld [vmem:[%s844 + $0x50] sm:$0xff]
                %867 = vst [vmem:[%s845 + $0x50] sm:$0xff] %v866
                %v868 = vld [vmem:[%s844 + $0x58] sm:$0xff]
                %869 = vst [vmem:[%s845 + $0x58] sm:$0xff] %v868
                %v870 = vld [vmem:[%s844 + $0x60] sm:$0xff]
                %871 = vst [vmem:[%s845 + $0x60] sm:$0xff] %v870
                %v872 = vld [vmem:[%s844 + $0x68] sm:$0xff]
                %873 = vst [vmem:[%s845 + $0x68] sm:$0xff] %v872
                %v874 = vld [vmem:[%s844 + $0x70] sm:$0xff]
                %875 = vst [vmem:[%s845 + $0x70] sm:$0xff] %v874
                %v876 = vld [vmem:[%s844 + $0x78] sm:$0xff]
                %877 = vst [vmem:[%s845 + $0x78] sm:$0xff] %v876
                %v878 = vld [vmem:[%s844 + $0x80] sm:$0xff]
                %879 = vst [vmem:[%s845 + $0x80] sm:$0xff] %v878
                %v880 = vld [vmem:[%s844 + $0x88] sm:$0xff]
                %881 = vst [vmem:[%s845 + $0x88] sm:$0xff] %v880
                %v882 = vld [vmem:[%s844 + $0x90] sm:$0xff]
                %883 = vst [vmem:[%s845 + $0x90] sm:$0xff] %v882
                %v884 = vld [vmem:[%s844 + $0x98] sm:$0xff]
                %885 = vst [vmem:[%s845 + $0x98] sm:$0xff] %v884
                %v886 = vld [vmem:[%s844 + $0xa0] sm:$0xff]
                %887 = vst [vmem:[%s845 + $0xa0] sm:$0xff] %v886
                %v888 = vld [vmem:[%s844 + $0xa8] sm:$0xff]
                %889 = vst [vmem:[%s845 + $0xa8] sm:$0xff] %v888
                %v890 = vld [vmem:[%s844 + $0xb0] sm:$0xff]
                %891 = vst [vmem:[%s845 + $0xb0] sm:$0xff] %v890
                %v892 = vld [vmem:[%s844 + $0xb8] sm:$0xff]
                %893 = vst [vmem:[%s845 + $0xb8] sm:$0xff] %v892
                %v894 = vld [vmem:[%s844 + $0xc0] sm:$0xff]
                %895 = vst [vmem:[%s845 + $0xc0] sm:$0xff] %v894
                %v896 = vld [vmem:[%s844 + $0xc8] sm:$0xff]
                %897 = vst [vmem:[%s845 + $0xc8] sm:$0xff] %v896
                %v898 = vld [vmem:[%s844 + $0xd0] sm:$0xff]
                %899 = vst [vmem:[%s845 + $0xd0] sm:$0xff] %v898
                %v900 = vld [vmem:[%s844 + $0xd8] sm:$0xff]
                %901 = vst [vmem:[%s845 + $0xd8] sm:$0xff] %v900
                %v902 = vld [vmem:[%s844 + $0xe0] sm:$0xff]
                %903 = vst [vmem:[%s845 + $0xe0] sm:$0xff] %v902
                %v904 = vld [vmem:[%s844 + $0xe8] sm:$0xff]
                %905 = vst [vmem:[%s845 + $0xe8] sm:$0xff] %v904
                %v906 = vld [vmem:[%s844 + $0xf0] sm:$0xff]
                %907 = vst [vmem:[%s845 + $0xf0] sm:$0xff] %v906
                %v908 = vld [vmem:[%s844 + $0xf8] sm:$0xff]
                %909 = vst [vmem:[%s845 + $0xf8] sm:$0xff] %v908
                %v910 = vld [vmem:[%s844 + $0x100] sm:$0xff]
                %911 = vst [vmem:[%s845 + $0x100] sm:$0xff] %v910
                %v912 = vld [vmem:[%s844 + $0x108] sm:$0xff]
                %913 = vst [vmem:[%s845 + $0x108] sm:$0xff] %v912
                %v914 = vld [vmem:[%s844 + $0x110] sm:$0xff]
                %915 = vst [vmem:[%s845 + $0x110] sm:$0xff] %v914
                %v916 = vld [vmem:[%s844 + $0x118] sm:$0xff]
                %917 = vst [vmem:[%s845 + $0x118] sm:$0xff] %v916
                %v918 = vld [vmem:[%s844 + $0x120] sm:$0xff]
                %919 = vst [vmem:[%s845 + $0x120] sm:$0xff] %v918
                %v920 = vld [vmem:[%s844 + $0x128] sm:$0xff]
                %921 = vst [vmem:[%s845 + $0x128] sm:$0xff] %v920
                %v922 = vld [vmem:[%s844 + $0x130] sm:$0xff]
                %923 = vst [vmem:[%s845 + $0x130] sm:$0xff] %v922
                %v924 = vld [vmem:[%s844 + $0x138] sm:$0xff]
                %925 = vst [vmem:[%s845 + $0x138] sm:$0xff] %v924
                %v926 = vld [vmem:[%s844 + $0x140] sm:$0xff]
                %927 = vst [vmem:[%s845 + $0x140] sm:$0xff] %v926
                %v928 = vld [vmem:[%s844 + $0x148] sm:$0xff]
                %929 = vst [vmem:[%s845 + $0x148] sm:$0xff] %v928
                %v930 = vld [vmem:[%s844 + $0x150] sm:$0xff]
                %931 = vst [vmem:[%s845 + $0x150] sm:$0xff] %v930
                %v932 = vld [vmem:[%s844 + $0x158] sm:$0xff]
                %933 = vst [vmem:[%s845 + $0x158] sm:$0xff] %v932
                %v934 = vld [vmem:[%s844 + $0x160] sm:$0xff]
                %935 = vst [vmem:[%s845 + $0x160] sm:$0xff] %v934
                %v936 = vld [vmem:[%s844 + $0x168] sm:$0xff]
                %937 = vst [vmem:[%s845 + $0x168] sm:$0xff] %v936
                %v938 = vld [vmem:[%s844 + $0x170] sm:$0xff]
                %939 = vst [vmem:[%s845 + $0x170] sm:$0xff] %v938
                %v940 = vld [vmem:[%s844 + $0x178] sm:$0xff]
                %941 = vst [vmem:[%s845 + $0x178] sm:$0xff] %v940
                %v942 = vld [vmem:[%s844 + $0x180] sm:$0xff]
                %943 = vst [vmem:[%s845 + $0x180] sm:$0xff] %v942
                %v944 = vld [vmem:[%s844 + $0x188] sm:$0xff]
                %945 = vst [vmem:[%s845 + $0x188] sm:$0xff] %v944
                %v946 = vld [vmem:[%s844 + $0x190] sm:$0xff]
                %947 = vst [vmem:[%s845 + $0x190] sm:$0xff] %v946
                %v948 = vld [vmem:[%s844 + $0x198] sm:$0xff]
                %949 = vst [vmem:[%s845 + $0x198] sm:$0xff] %v948
                %v950 = vld [vmem:[%s844 + $0x1a0] sm:$0xff]
                %951 = vst [vmem:[%s845 + $0x1a0] sm:$0xff] %v950
                %v952 = vld [vmem:[%s844 + $0x1a8] sm:$0xff]
                %953 = vst [vmem:[%s845 + $0x1a8] sm:$0xff] %v952
                %v954 = vld [vmem:[%s844 + $0x1b0] sm:$0xff]
                %955 = vst [vmem:[%s845 + $0x1b0] sm:$0xff] %v954
                %v956 = vld [vmem:[%s844 + $0x1b8] sm:$0xff]
                %957 = vst [vmem:[%s845 + $0x1b8] sm:$0xff] %v956
                %v958 = vld [vmem:[%s844 + $0x1c0] sm:$0xff]
                %959 = vst [vmem:[%s845 + $0x1c0] sm:$0xff] %v958
                %v960 = vld [vmem:[%s844 + $0x1c8] sm:$0xff]
                %961 = vst [vmem:[%s845 + $0x1c8] sm:$0xff] %v960
                %v962 = vld [vmem:[%s844 + $0x1d0] sm:$0xff]
                %963 = vst [vmem:[%s845 + $0x3a0] sm:$0xff] %v962
                %v964 = vld [vmem:[%s844 + $0x1d8] sm:$0xff]
                %965 = vst [vmem:[%s845 + $0x3a8] sm:$0xff] %v964
                %v966 = vld [vmem:[%s844 + $0x1e0] sm:$0xff]
                %967 = vst [vmem:[%s845 + $0x3b0] sm:$0xff] %v966
                %v968 = vld [vmem:[%s844 + $0x1e8] sm:$0xff]
                %969 = vst [vmem:[%s845 + $0x3b8] sm:$0xff] %v968
                %v970 = vld [vmem:[%s844 + $0x1f0] sm:$0xff]
                %971 = vst [vmem:[%s845 + $0x3c0] sm:$0xff] %v970
                %v972 = vld [vmem:[%s844 + $0x1f8] sm:$0xff]
                %973 = vst [vmem:[%s845 + $0x3c8] sm:$0xff] %v972
                %v974 = vld [vmem:[%s844 + $0x200] sm:$0xff]
                %975 = vst [vmem:[%s845 + $0x3d0] sm:$0xff] %v974
                %v976 = vld [vmem:[%s844 + $0x208] sm:$0xff]
                %977 = vst [vmem:[%s845 + $0x3d8] sm:$0xff] %v976
                %v978 = vld [vmem:[%s844 + $0x210] sm:$0xff]
                %979 = vst [vmem:[%s845 + $0x3e0] sm:$0xff] %v978
                %v980 = vld [vmem:[%s844 + $0x218] sm:$0xff]
                %981 = vst [vmem:[%s845 + $0x3e8] sm:$0xff] %v980
                %v982 = vld [vmem:[%s844 + $0x220] sm:$0xff]
                %983 = vst [vmem:[%s845 + $0x3f0] sm:$0xff] %v982
                %v984 = vld [vmem:[%s844 + $0x228] sm:$0xff]
                %985 = vst [vmem:[%s845 + $0x3f8] sm:$0xff] %v984
                %v986 = vld [vmem:[%s844 + $0x230] sm:$0xff]
                %987 = vst [vmem:[%s845 + $0x400] sm:$0xff] %v986
                %v988 = vld [vmem:[%s844 + $0x238] sm:$0xff]
                %989 = vst [vmem:[%s845 + $0x408] sm:$0xff] %v988
                %v990 = vld [vmem:[%s844 + $0x240] sm:$0xff]
                %991 = vst [vmem:[%s845 + $0x410] sm:$0xff] %v990
                %v992 = vld [vmem:[%s844 + $0x248] sm:$0xff]
                %993 = vst [vmem:[%s845 + $0x418] sm:$0xff] %v992
                %v994 = vld [vmem:[%s844 + $0x250] sm:$0xff]
                %995 = vst [vmem:[%s845 + $0x420] sm:$0xff] %v994
                %v996 = vld [vmem:[%s844 + $0x258] sm:$0xff]
                %997 = vst [vmem:[%s845 + $0x428] sm:$0xff] %v996
                %v998 = vld [vmem:[%s844 + $0x260] sm:$0xff]
                %999 = vst [vmem:[%s845 + $0x430] sm:$0xff] %v998
                %v1000 = vld [vmem:[%s844 + $0x268] sm:$0xff]
                %1001 = vst [vmem:[%s845 + $0x438] sm:$0xff] %v1000
                %v1002 = vld [vmem:[%s844 + $0x270] sm:$0xff]
                %1003 = vst [vmem:[%s845 + $0x440] sm:$0xff] %v1002
                %v1004 = vld [vmem:[%s844 + $0x278] sm:$0xff]
                %1005 = vst [vmem:[%s845 + $0x448] sm:$0xff] %v1004
                %v1006 = vld [vmem:[%s844 + $0x280] sm:$0xff]
                %1007 = vst [vmem:[%s845 + $0x450] sm:$0xff] %v1006
                %v1008 = vld [vmem:[%s844 + $0x288] sm:$0xff]
                %1009 = vst [vmem:[%s845 + $0x458] sm:$0xff] %v1008
                %v1010 = vld [vmem:[%s844 + $0x290] sm:$0xff]
                %1011 = vst [vmem:[%s845 + $0x460] sm:$0xff] %v1010
                %v1012 = vld [vmem:[%s844 + $0x298] sm:$0xff]
                %1013 = vst [vmem:[%s845 + $0x468] sm:$0xff] %v1012
                %v1014 = vld [vmem:[%s844 + $0x2a0] sm:$0xff]
                %1015 = vst [vmem:[%s845 + $0x470] sm:$0xff] %v1014
                %v1016 = vld [vmem:[%s844 + $0x2a8] sm:$0xff]
                %1017 = vst [vmem:[%s845 + $0x478] sm:$0xff] %v1016
                %v1018 = vld [vmem:[%s844 + $0x2b0] sm:$0xff]
                %1019 = vst [vmem:[%s845 + $0x480] sm:$0xff] %v1018
                %v1020 = vld [vmem:[%s844 + $0x2b8] sm:$0xff]
                %1021 = vst [vmem:[%s845 + $0x488] sm:$0xff] %v1020
                %v1022 = vld [vmem:[%s844 + $0x2c0] sm:$0xff]
                %1023 = vst [vmem:[%s845 + $0x490] sm:$0xff] %v1022
                %v1024 = vld [vmem:[%s844 + $0x2c8] sm:$0xff]
                %1025 = vst [vmem:[%s845 + $0x498] sm:$0xff] %v1024
                %v1026 = vld [vmem:[%s844 + $0x2d0] sm:$0xff]
                %1027 = vst [vmem:[%s845 + $0x4a0] sm:$0xff] %v1026
                %v1028 = vld [vmem:[%s844 + $0x2d8] sm:$0xff]
                %1029 = vst [vmem:[%s845 + $0x4a8] sm:$0xff] %v1028
                %v1030 = vld [vmem:[%s844 + $0x2e0] sm:$0xff]
                %1031 = vst [vmem:[%s845 + $0x4b0] sm:$0xff] %v1030
                %v1032 = vld [vmem:[%s844 + $0x2e8] sm:$0xff]
                %1033 = vst [vmem:[%s845 + $0x4b8] sm:$0xff] %v1032
                %v1034 = vld [vmem:[%s844 + $0x2f0] sm:$0xff]
                %1035 = vst [vmem:[%s845 + $0x4c0] sm:$0xff] %v1034
                %v1036 = vld [vmem:[%s844 + $0x2f8] sm:$0xff]
                %1037 = vst [vmem:[%s845 + $0x4c8] sm:$0xff] %v1036
                %v1038 = vld [vmem:[%s844 + $0x300] sm:$0xff]
                %1039 = vst [vmem:[%s845 + $0x4d0] sm:$0xff] %v1038
                %v1040 = vld [vmem:[%s844 + $0x308] sm:$0xff]
                %1041 = vst [vmem:[%s845 + $0x4d8] sm:$0xff] %v1040
                %v1042 = vld [vmem:[%s844 + $0x310] sm:$0xff]
                %1043 = vst [vmem:[%s845 + $0x4e0] sm:$0xff] %v1042
                %v1044 = vld [vmem:[%s844 + $0x318] sm:$0xff]
                %1045 = vst [vmem:[%s845 + $0x4e8] sm:$0xff] %v1044
                %v1046 = vld [vmem:[%s844 + $0x320] sm:$0xff]
                %1047 = vst [vmem:[%s845 + $0x4f0] sm:$0xff] %v1046
                %v1048 = vld [vmem:[%s844 + $0x328] sm:$0xff]
                %1049 = vst [vmem:[%s845 + $0x4f8] sm:$0xff] %v1048
                %v1050 = vld [vmem:[%s844 + $0x330] sm:$0xff]
                %1051 = vst [vmem:[%s845 + $0x500] sm:$0xff] %v1050
                %v1052 = vld [vmem:[%s844 + $0x338] sm:$0xff]
                %1053 = vst [vmem:[%s845 + $0x508] sm:$0xff] %v1052
                %v1054 = vld [vmem:[%s844 + $0x340] sm:$0xff]
                %1055 = vst [vmem:[%s845 + $0x510] sm:$0xff] %v1054
                %v1056 = vld [vmem:[%s844 + $0x348] sm:$0xff]
                %1057 = vst [vmem:[%s845 + $0x518] sm:$0xff] %v1056
                %v1058 = vld [vmem:[%s844 + $0x350] sm:$0xff]
                %1059 = vst [vmem:[%s845 + $0x520] sm:$0xff] %v1058
                %v1060 = vld [vmem:[%s844 + $0x358] sm:$0xff]
                %1061 = vst [vmem:[%s845 + $0x528] sm:$0xff] %v1060
                %v1062 = vld [vmem:[%s844 + $0x360] sm:$0xff]
                %1063 = vst [vmem:[%s845 + $0x530] sm:$0xff] %v1062
                %v1064 = vld [vmem:[%s844 + $0x368] sm:$0xff]
                %1065 = vst [vmem:[%s845 + $0x538] sm:$0xff] %v1064
                %v1066 = vld [vmem:[%s844 + $0x370] sm:$0xff]
                %1067 = vst [vmem:[%s845 + $0x540] sm:$0xff] %v1066
                %v1068 = vld [vmem:[%s844 + $0x378] sm:$0xff]
                %1069 = vst [vmem:[%s845 + $0x548] sm:$0xff] %v1068
                %v1070 = vld [vmem:[%s844 + $0x380] sm:$0xff]
                %1071 = vst [vmem:[%s845 + $0x550] sm:$0xff] %v1070
                %v1072 = vld [vmem:[%s844 + $0x388] sm:$0xff]
                %1073 = vst [vmem:[%s845 + $0x558] sm:$0xff] %v1072
                %v1074 = vld [vmem:[%s844 + $0x390] sm:$0xff]
                %1075 = vst [vmem:[%s845 + $0x560] sm:$0xff] %v1074
                %v1076 = vld [vmem:[%s844 + $0x398] sm:$0xff]
                %1077 = vst [vmem:[%s845 + $0x568] sm:$0xff] %v1076
              $region68: #{tpu_custom_call.1} parent=62 // loop_footer
                %s843 = sadd.s32 1, %s839
              $region69: #{tpu_custom_call.1} parent=62 // loop_footer_branch
                %838 = sbr.rel target = $region65
              $region70: #{tpu_custom_call.1} parent=62 // loop_exit
                _
            $region63: #{tpu_custom_call.1} parent=58 // pred_fallthru
              _
            // Predicated region
            $region71: #{tpu_custom_call.1} parent=58 // pred_check
              _
            $region72: #{tpu_custom_call.1} parent=58 // pred_check_branch
              %1079 = sbr.rel target = $region74
            $region73: #{tpu_custom_call.1} parent=58 // pred_region
              _
            $region74: #{tpu_custom_call.1} parent=58 // pred_fallthru
              _
          $region59: #{tpu_custom_call.1} parent=54 // pred_fallthru
            _
          %1080 = vnop
        $region55: #{tpu_custom_call.1} parent=46 // pred_fallthru
          _
      $region47: #{tpu_custom_call.1} parent=5 // pred_fallthru
        _
      %p1081 = scmp.le.s32.totalorder 2, %s8
      // Predicated region
      $region75: #{tpu_custom_call.1} parent=5 // pred_check
        %p1082 = pneg %p1081
      $region76: #{tpu_custom_call.1} parent=5 // pred_check_branch
        %1084 = sbr.rel (%p1082) target = $region78
      $region77: #{tpu_custom_call.1} parent=5 // pred_region
        %s1085 = ssub.s32 %s8, 2
        // Predicated region
        $region79: #{tpu_custom_call.1} parent=77 // pred_check
          %p1086 = pneg %p89
        $region80: #{tpu_custom_call.1} parent=77 // pred_check_branch
          %1088 = sbr.rel (%p1086) target = $region82
        $region81: #{tpu_custom_call.1} parent=77 // pred_region
          %s1089 = sand.u32 %s74, 1
          %s1090 = sand.u32 %s74, 1
          %s1091 = smul.addr %s1090, 928
          %s1092 = scalar_lea.vmem [#allocation3], %s1091
        $region82: #{tpu_custom_call.1} parent=77 // pred_fallthru
          _
      $region78: #{tpu_custom_call.1} parent=5 // pred_fallthru
        _
    $region6: #{tpu_custom_call.1} parent=1 // loop_footer
      %s12 = sadd.s32 1, %s8
    $region7: #{tpu_custom_call.1} parent=1 // loop_footer_branch
      %7 = sbr.rel target = $region3
    $region8: #{tpu_custom_call.1} parent=1 // loop_exit
      _

</llo_original>
